<compile_context>
chip_gen: v5e
topology: v5e:2x2
jax: 0.10.0
libtpu: 0.0.40
codegen_flags: <defaults>
</compile_context>

<pallas_src>
import jax
import jax.numpy as jnp
from jax import lax
from jax.experimental import pallas as pl
from jax.experimental.pallas import tpu as pltpu

_LANE = 128
_SUBLANE = 8


def _round_up(x, m):
    return (x + m - 1) // m * m


def _make_kernel(K, stride, dilation, tile_h, Wo_pad, Cin, mxu_dtype):
    h_ext = (tile_h - 1) * stride + 1
    w_ext = (Wo_pad - 1) * stride + 1
    tile_p = tile_h * Wo_pad

    def kernel(x_ref, dw_ref, pw_ref, o_ref):
        # x_ref : (1, tile_in_h, Wp_pad, Cin) bf16   ((1, 1, ...) on the stacked fallback path)
        # dw_ref: (K*K, 1, Cin) f32   depthwise taps
        # pw_ref: (Cin, Cout_p) bf16  pointwise weights
        # o_ref : (1, tile_p, Cout_p) lane-dense output tile (rows flattened)
        ndim = len(x_ref.shape)

        def rows(lo):
            # H is a leading (non-tiled) dim, so slicing it never triggers a relayout.
            if stride == 1:
                idx = slice(lo, lo + h_ext)
            else:
                idx = pl.ds(lo, tile_h, stride=stride)   # strided row select
            return x_ref[0, 0, idx] if ndim == 5 else x_ref[0, idx]

        wp = x_ref.shape[-2]
        # Depthwise: per-kw full-width f32 accumulators on the VPU.  Only the K combines
        # below need (possibly) misaligned W slices, instead of K*K per-tap ones.
        accs = [jnp.zeros((tile_h, wp, Cin), jnp.float32) for _ in range(K)]
        for kh in range(K):
            xh32 = rows(kh * dilation).astype(jnp.float32)   # one upcast per kh, not per tap
            for kw in range(K):
                accs[kw] = accs[kw] + xh32 * dw_ref[kh * K + kw]
        dw_out = None
        for kw in range(K):
            w0 = kw * dilation
            sl = accs[kw][:, w0:w0 + w_ext, :]
            if stride != 1:
                # TODO(synk): pre-split the input into stride phases in the wrapper so this
                # strided subsample becomes a contiguous, aligned slice.
                sl = sl[:, ::stride, :]
            dw_out = sl if dw_out is None else dw_out + sl

        # Pointwise 1x1: a single MXU contraction per tile, bf16 operands, f32 accumulation.
        lhs = dw_out.reshape(tile_p, Cin).astype(mxu_dtype)   # free view: Wo_pad % 8 == 0
        out = jnp.dot(lhs, pw_ref[...], preferred_element_type=jnp.float32)
        o_ref[0] = out.astype(o_ref.dtype)

    return kernel


def _vmem_estimate(tile_h, Wo_pad, Wp_pad, Cin, Cout_p, K, stride, dilation, out_bytes):
    """Rough per-step VMEM bytes: pipeline buffers + live in-kernel temporaries + weights."""
    cin_lane = _round_up(Cin, _LANE)
    wp_sub = _round_up(Wp_pad, _SUBLANE)
    tile_in_h = (tile_h - 1) * stride + (K - 1) * dilation + 1
    tile_p = tile_h * Wo_pad
    in_tile = tile_in_h * wp_sub * cin_lane * 2                         # bf16 activations
    out_tile = _round_up(tile_p, _SUBLANE) * Cout_p * out_bytes
    acc_tmp = (K + 1) * tile_h * wp_sub * cin_lane * 4                  # f32 dw accumulators
    mm_tmp = _round_up(tile_p, _SUBLANE) * (cin_lane * 2 + Cout_p * 4)  # matmul lhs + f32 out
    w_bytes = 2 * (K * K * _SUBLANE * cin_lane * 4
                   + _round_up(Cin, _SUBLANE) * Cout_p * 2)
    return 2 * (in_tile + out_tile) + acc_tmp + mm_tmp + w_bytes


def _pick_tile_h(N, Ho, Wo_pad, Wp_pad, Cin, Cout_p, K, stride, dilation, out_bytes, budget):
    """Largest divisor of Ho that fits the VMEM budget, preferring enough grid steps to feed
    both TensorCores on dual-TC (v7x) parts."""
    divs = [d for d in range(1, Ho + 1) if Ho % d == 0]
    fits = [d for d in divs
            if _vmem_estimate(d, Wo_pad, Wp_pad, Cin, Cout_p, K, stride, dilation,
                              out_bytes) <= budget]
    if not fits:
        # TODO(synk): add a Wo / Cout tiling fallback when even a single output row blows the
        # budget (large W*Cin on v7x's 64 MiB VMEM) instead of hoping tile_h=1 still compiles.
        return 1
    target_steps = min(4, N * Ho)     # >= 2 grid steps per TensorCore on dual-TC parts
    multi = [d for d in fits if N * (Ho // d) >= target_steps]
    return max(multi) if multi else max(fits)


def depthwise_separable_conv(x_nchw, dw_weight, pw_weight, *, kernel_size=3, stride=1,
                             dilation=1, tile_h=None, mxu_dtype=jnp.bfloat16):
    """Fused depthwise (KxK, groups=Cin, no bias) + pointwise (1x1, no bias) convolution.

    x_nchw: (N, Cin, H, W); dw_weight: (Cin, 1, K, K); pw_weight: (Cout, Cin, 1, 1).
    Returns (N, Cout, Ho, Wo) with the same semantics as the PyTorch module."""
    N, Cin, H, W = x_nchw.shape
    Cout = pw_weight.shape[0]
    K = kernel_size
    pad = ((K - 1) // 2) * dilation            # matches the PyTorch module (odd K assumed)
    Ho = (H + 2 * pad - dilation * (K - 1) - 1) // stride + 1
    Wo = (W + 2 * pad - dilation * (K - 1) - 1) // stride + 1
    Cout_p = _round_up(Cout, _LANE)
    Wo_pad = _round_up(Wo, _SUBLANE)           # aligned (h, w) flattening + unmasked stores

    # Heavily padded Cout -> bf16 writeback halves the padded HBM store traffic; the wrapper
    # casts back to the caller dtype after slicing the padding off (accumulation stays f32).
    out_dtype = jnp.bfloat16 if (Cout * 2 <= Cout_p or x_nchw.dtype == jnp.bfloat16) \
        else jnp.float32
    out_bytes = jnp.dtype(out_dtype).itemsize

    # ---- wrapper-side layout plumbing -------------------------------------------------------
    x_nhwc = jnp.transpose(x_nchw, (0, 2, 3, 1))                        # (N, H, W, Cin)
    wp_needed = (Wo_pad - 1) * stride + (K - 1) * dilation + 1
    extra_w = max(0, wp_needed - (W + 2 * pad))
    x_pad = jnp.pad(x_nhwc, ((0, 0), (pad, pad), (pad, pad + extra_w), (0, 0)))
    x_pad = x_pad.astype(mxu_dtype)            # bf16 activations: half the input DMA bytes
    Hp, Wp_pad = x_pad.shape[1], x_pad.shape[2]

    dw_taps = jnp.transpose(dw_weight[:, 0, :, :], (1, 2, 0))           # (K, K, Cin)
    dw_taps = dw_taps.reshape(K * K, 1, Cin).astype(jnp.float32)        # VPU math in f32
    pw_mat = jnp.transpose(pw_weight[:, :, 0, 0], (1, 0))               # (Cin, Cout)
    pw_mat = jnp.pad(pw_mat, ((0, 0), (0, Cout_p - Cout))).astype(mxu_dtype)

    # ---- tiling ------------------------------------------------------------------------------
    try:
        vmem_cap = int(pltpu.get_tpu_info().vmem_capacity_bytes)
    except Exception:
        vmem_cap = 64 * 2 ** 20                # assume the smallest (v7x-sized) VMEM
    budget = vmem_cap // 2                     # 64 MiB on v5e/v6e, 32 MiB on v7x

    if tile_h is None:
        tile_h = _pick_tile_h(N, Ho, Wo_pad, Wp_pad, Cin, Cout_p, K, stride, dilation,
                              out_bytes, budget)
    else:
        assert 1 <= tile_h <= Ho and Ho % tile_h == 0, "tile_h must divide Ho"
    T = Ho // tile_h
    row_step = tile_h * stride
    tile_in_h = (tile_h - 1) * stride + (K - 1) * dilation + 1
    tile_p = tile_h * Wo_pad
    assert (T - 1) * row_step + tile_in_h <= Hp
    est = _vmem_estimate(tile_h, Wo_pad, Wp_pad, Cin, Cout_p, K, stride, dilation, out_bytes)
    vmem_limit = int(min(vmem_cap * 7 // 8, max(est + (8 << 20), 32 << 20)))

    kernel = _make_kernel(K, stride, dilation, tile_h, Wo_pad, Cin, mxu_dtype)
    # TODO(synk): mark these constant-index weight specs pipeline_mode=pl.Buffered(1) to skip
    # the pointless double buffer (saves ~K*K*Cin*Cout_p*2 B of VMEM at large channel counts).
    dw_spec = pl.BlockSpec((K * K, 1, Cin), lambda n, t: (0, 0, 0))
    pw_spec = pl.BlockSpec((Cin, Cout_p), lambda n, t: (0, 0))
    out_spec = pl.BlockSpec((1, tile_p, Cout_p), lambda n, t: (n, t, 0))

    def _run(use_element):
        if use_element:
            # Halo'd row windows are DMA'd straight out of x_pad: no extra HBM pass and no
            # duplicated halo rows in HBM.
            x_arg = x_pad
            x_spec = pl.BlockSpec((1, pl.Element(tile_in_h), Wp_pad, Cin),
                                  lambda n, t: (n, t * row_step, 0, 0))
        else:
            # Fallback: pre-materialise halo'd row tiles (costs an extra input HBM pass).
            x_arg = jnp.stack(
                [lax.slice_in_dim(x_pad, t * row_step, t * row_step + tile_in_h, axis=1)
                 for t in range(T)], axis=1)                # (N, T, tile_in_h, Wp_pad, Cin)
            x_spec = pl.BlockSpec((1, 1, tile_in_h, Wp_pad, Cin),
                                  lambda n, t: (n, t, 0, 0, 0))
        return pl.pallas_call(
            kernel,
            out_shape=jax.ShapeDtypeStruct((N, Ho * Wo_pad, Cout_p), out_dtype),
            grid_spec=pltpu.PrefetchScalarGridSpec(
                num_scalar_prefetch=0,
                grid=(N, T),
                in_specs=[x_spec, dw_spec, pw_spec],
                out_specs=out_spec),
            compiler_params=pltpu.CompilerParams(
                dimension_semantics=("parallel", "parallel"),
                vmem_limit_bytes=vmem_limit),
        )(x_arg, dw_taps, pw_mat)

    if hasattr(pl, "Element"):
        try:
            out_flat = _run(True)
        except Exception:  # pragma: no cover - jax without Element TPU lowering support
            out_flat = _run(False)
    else:
        out_flat = _run(False)

    out = out_flat.reshape(N, Ho, Wo_pad, Cout_p)[:, :, :Wo, :Cout]     # strip padding (views)
    out = out.astype(x_nchw.dtype)
    return jnp.transpose(out, (0, 3, 1, 2))                             # back to NCHW


def _reference(x_nchw, dw_weight, pw_weight, *, kernel_size=3, stride=1, dilation=1):
    """Pure-JAX reference (lax conv) matching the PyTorch module."""
    pad = ((kernel_size - 1) // 2) * dilation
    Cin = x_nchw.shape[1]
    dn = lax.conv_dimension_numbers(x_nchw.shape, dw_weight.shape, ("NCHW", "OIHW", "NCHW"))
    y = lax.conv_general_dilated(
        x_nchw, dw_weight, window_strides=(stride, stride),
        padding=((pad, pad), (pad, pad)), rhs_dilation=(dilation, dilation),
        dimension_numbers=dn, feature_group_count=Cin)
    y = lax.conv_general_dilated(
        y, pw_weight, window_strides=(1, 1), padding=((0, 0), (0, 0)),
        dimension_numbers=dn)
    return y


if __name__ == "__main__":
    K = 3
    key = jax.random.PRNGKey(0)
    kx, kdw, kpw = jax.random.split(key, 3)

    # Case 1: module defaults at small shapes (N=2, Cin=4, Cout=8, 16x16 spatial).
    N, nin, nout, H, W = 2, 4, 8, 16, 16
    x = jax.random.normal(kx, (N, nin, H, W), dtype=jnp.float32)
    dw_w = jax.random.normal(kdw, (nin, 1, K, K), dtype=jnp.float32) * 0.1
    pw_w = jax.random.normal(kpw, (nout, nin, 1, 1), dtype=jnp.float32) * 0.1
    ref = _reference(x, dw_w, pw_w, kernel_size=K)
    # auto tiling (2 halo'd row tiles / 4 grid steps), single tile, and forced 4-way tiling.
    for th in (None, 16, 4):
        out = depthwise_separable_conv(x, dw_w, pw_w, kernel_size=K, tile_h=th)
        out = jax.block_until_ready(out)
        assert out.shape == ref.shape, (out.shape, ref.shape)
        err = float(jnp.max(jnp.abs(out - ref)))
        # bf16 activations / MXU operands / writeback with f32 accumulation.
        assert err < 2e-2, (th, err)

    # Case 2: odd spatial / channel sizes exercising the Wo->8 and Cout->128 padding paths.
    x2 = jax.random.normal(kx, (1, 3, 13, 15), dtype=jnp.float32)
    dw2 = jax.random.normal(kdw, (3, 1, K, K), dtype=jnp.float32) * 0.1
    pw2 = jax.random.normal(kpw, (5, 3, 1, 1), dtype=jnp.float32) * 0.1
    ref2 = _reference(x2, dw2, pw2, kernel_size=K)
    out2 = jax.block_until_ready(depthwise_separable_conv(x2, dw2, pw2, kernel_size=K))
    assert out2.shape == ref2.shape, (out2.shape, ref2.shape)
    assert float(jnp.max(jnp.abs(out2 - ref2))) < 2e-2

    print("KERNEL_OK")
</pallas_src>

<mosaic_0001>
module attributes {stable_mosaic.version = 11 : i64} {
  func.func @kernel(%arg0: i32, %arg1: i32, %arg2: memref<1x1x10x18x4xbf16, #tpu.memory_space<vmem>>, %arg3: memref<9x1x4xf32, #tpu.memory_space<vmem>>, %arg4: memref<4x128xbf16, #tpu.memory_space<vmem>>, %arg5: memref<1x128x128xbf16, #tpu.memory_space<vmem>>) attributes {dimension_semantics = [#tpu.dimension_semantics<parallel>, #tpu.dimension_semantics<parallel>], iteration_bounds = array<i64: 2, 2>, scalar_prefetch = 0 : i64, scratch_operands = 0 : i64, tpu.core_type = #tpu.core_type<tc>, window_params = [{transform_indices = @transform_0, window_bounds = array<i64: 1, 1, 10, 18, 4>}, {pipeline_mode = #tpu.pipeline_mode<synchronous>, transform_indices = @transform_1, window_bounds = array<i64: 9, 1, 4>}, {pipeline_mode = #tpu.pipeline_mode<synchronous>, transform_indices = @transform_2, window_bounds = array<i64: 4, 128>}, {transform_indices = @transform_3, window_bounds = array<i64: 1, 128, 128>}]} {
    %cst = arith.constant 0.000000e+00 : f32
    %0 = vector.broadcast %cst : f32 to vector<8x18x4xf32>
    %cst_0 = arith.constant 0.000000e+00 : f32
    %1 = vector.broadcast %cst_0 : f32 to vector<8x18x4xf32>
    %cst_1 = arith.constant 0.000000e+00 : f32
    %2 = vector.broadcast %cst_1 : f32 to vector<8x18x4xf32>
    %c0 = arith.constant 0 : index
    %c0_2 = arith.constant 0 : index
    %c0_3 = arith.constant 0 : index
    %c0_4 = arith.constant 0 : index
    %c0_5 = arith.constant 0 : index
    %3 = vector.load %arg2[%c0, %c0_2, %c0_3, %c0_4, %c0_5] : memref<1x1x10x18x4xbf16, #tpu.memory_space<vmem>>, vector<1x1x8x18x4xbf16>
    %4 = vector.shape_cast %3 : vector<1x1x8x18x4xbf16> to vector<8x18x4xbf16>
    %5 = arith.extf %4 : vector<8x18x4xbf16> to vector<8x18x4xf32>
    %c0_6 = arith.constant 0 : index
    %c0_7 = arith.constant 0 : index
    %c0_8 = arith.constant 0 : index
    %6 = vector.load %arg3[%c0_6, %c0_7, %c0_8] : memref<9x1x4xf32, #tpu.memory_space<vmem>>, vector<1x1x4xf32>
    %7 = vector.shape_cast %6 : vector<1x1x4xf32> to vector<1x4xf32>
    %8 = vector.shape_cast %7 : vector<1x4xf32> to vector<1x1x4xf32>
    %9 = vector.broadcast %8 : vector<1x1x4xf32> to vector<8x18x4xf32>
    %10 = arith.mulf %5, %9 : vector<8x18x4xf32>
    %11 = arith.addf %0, %10 : vector<8x18x4xf32>
    %c1 = arith.constant 1 : index
    %c0_9 = arith.constant 0 : index
    %c0_10 = arith.constant 0 : index
    %12 = vector.load %arg3[%c1, %c0_9, %c0_10] : memref<9x1x4xf32, #tpu.memory_space<vmem>>, vector<1x1x4xf32>
    %13 = vector.shape_cast %12 : vector<1x1x4xf32> to vector<1x4xf32>
    %14 = vector.shape_cast %13 : vector<1x4xf32> to vector<1x1x4xf32>
    %15 = vector.broadcast %14 : vector<1x1x4xf32> to vector<8x18x4xf32>
    %16 = arith.mulf %5, %15 : vector<8x18x4xf32>
    %17 = arith.addf %1, %16 : vector<8x18x4xf32>
    %c2 = arith.constant 2 : index
    %c0_11 = arith.constant 0 : index
    %c0_12 = arith.constant 0 : index
    %18 = vector.load %arg3[%c2, %c0_11, %c0_12] : memref<9x1x4xf32, #tpu.memory_space<vmem>>, vector<1x1x4xf32>
    %19 = vector.shape_cast %18 : vector<1x1x4xf32> to vector<1x4xf32>
    %20 = vector.shape_cast %19 : vector<1x4xf32> to vector<1x1x4xf32>
    %21 = vector.broadcast %20 : vector<1x1x4xf32> to vector<8x18x4xf32>
    %22 = arith.mulf %5, %21 : vector<8x18x4xf32>
    %23 = arith.addf %2, %22 : vector<8x18x4xf32>
    %c0_13 = arith.constant 0 : index
    %c0_14 = arith.constant 0 : index
    %c1_15 = arith.constant 1 : index
    %c0_16 = arith.constant 0 : index
    %c0_17 = arith.constant 0 : index
    %24 = vector.load %arg2[%c0_13, %c0_14, %c1_15, %c0_16, %c0_17] : memref<1x1x10x18x4xbf16, #tpu.memory_space<vmem>>, vector<1x1x8x18x4xbf16>
    %25 = vector.shape_cast %24 : vector<1x1x8x18x4xbf16> to vector<8x18x4xbf16>
    %26 = arith.extf %25 : vector<8x18x4xbf16> to vector<8x18x4xf32>
    %c3 = arith.constant 3 : index
    %c0_18 = arith.constant 0 : index
    %c0_19 = arith.constant 0 : index
    %27 = vector.load %arg3[%c3, %c0_18, %c0_19] : memref<9x1x4xf32, #tpu.memory_space<vmem>>, vector<1x1x4xf32>
    %28 = vector.shape_cast %27 : vector<1x1x4xf32> to vector<1x4xf32>
    %29 = vector.shape_cast %28 : vector<1x4xf32> to vector<1x1x4xf32>
    %30 = vector.broadcast %29 : vector<1x1x4xf32> to vector<8x18x4xf32>
    %31 = arith.mulf %26, %30 : vector<8x18x4xf32>
    %32 = arith.addf %11, %31 : vector<8x18x4xf32>
    %c4 = arith.constant 4 : index
    %c0_20 = arith.constant 0 : index
    %c0_21 = arith.constant 0 : index
    %33 = vector.load %arg3[%c4, %c0_20, %c0_21] : memref<9x1x4xf32, #tpu.memory_space<vmem>>, vector<1x1x4xf32>
    %34 = vector.shape_cast %33 : vector<1x1x4xf32> to vector<1x4xf32>
    %35 = vector.shape_cast %34 : vector<1x4xf32> to vector<1x1x4xf32>
    %36 = vector.broadcast %35 : vector<1x1x4xf32> to vector<8x18x4xf32>
    %37 = arith.mulf %26, %36 : vector<8x18x4xf32>
    %38 = arith.addf %17, %37 : vector<8x18x4xf32>
    %c5 = arith.constant 5 : index
    %c0_22 = arith.constant 0 : index
    %c0_23 = arith.constant 0 : index
    %39 = vector.load %arg3[%c5, %c0_22, %c0_23] : memref<9x1x4xf32, #tpu.memory_space<vmem>>, vector<1x1x4xf32>
    %40 = vector.shape_cast %39 : vector<1x1x4xf32> to vector<1x4xf32>
    %41 = vector.shape_cast %40 : vector<1x4xf32> to vector<1x1x4xf32>
    %42 = vector.broadcast %41 : vector<1x1x4xf32> to vector<8x18x4xf32>
    %43 = arith.mulf %26, %42 : vector<8x18x4xf32>
    %44 = arith.addf %23, %43 : vector<8x18x4xf32>
    %c0_24 = arith.constant 0 : index
    %c0_25 = arith.constant 0 : index
    %c2_26 = arith.constant 2 : index
    %c0_27 = arith.constant 0 : index
    %c0_28 = arith.constant 0 : index
    %45 = vector.load %arg2[%c0_24, %c0_25, %c2_26, %c0_27, %c0_28] : memref<1x1x10x18x4xbf16, #tpu.memory_space<vmem>>, vector<1x1x8x18x4xbf16>
    %46 = vector.shape_cast %45 : vector<1x1x8x18x4xbf16> to vector<8x18x4xbf16>
    %47 = arith.extf %46 : vector<8x18x4xbf16> to vector<8x18x4xf32>
    %c6 = arith.constant 6 : index
    %c0_29 = arith.constant 0 : index
    %c0_30 = arith.constant 0 : index
    %48 = vector.load %arg3[%c6, %c0_29, %c0_30] : memref<9x1x4xf32, #tpu.memory_space<vmem>>, vector<1x1x4xf32>
    %49 = vector.shape_cast %48 : vector<1x1x4xf32> to vector<1x4xf32>
    %50 = vector.shape_cast %49 : vector<1x4xf32> to vector<1x1x4xf32>
    %51 = vector.broadcast %50 : vector<1x1x4xf32> to vector<8x18x4xf32>
    %52 = arith.mulf %47, %51 : vector<8x18x4xf32>
    %53 = arith.addf %32, %52 : vector<8x18x4xf32>
    %c7 = arith.constant 7 : index
    %c0_31 = arith.constant 0 : index
    %c0_32 = arith.constant 0 : index
    %54 = vector.load %arg3[%c7, %c0_31, %c0_32] : memref<9x1x4xf32, #tpu.memory_space<vmem>>, vector<1x1x4xf32>
    %55 = vector.shape_cast %54 : vector<1x1x4xf32> to vector<1x4xf32>
    %56 = vector.shape_cast %55 : vector<1x4xf32> to vector<1x1x4xf32>
    %57 = vector.broadcast %56 : vector<1x1x4xf32> to vector<8x18x4xf32>
    %58 = arith.mulf %47, %57 : vector<8x18x4xf32>
    %59 = arith.addf %38, %58 : vector<8x18x4xf32>
    %c8 = arith.constant 8 : index
    %c0_33 = arith.constant 0 : index
    %c0_34 = arith.constant 0 : index
    %60 = vector.load %arg3[%c8, %c0_33, %c0_34] : memref<9x1x4xf32, #tpu.memory_space<vmem>>, vector<1x1x4xf32>
    %61 = vector.shape_cast %60 : vector<1x1x4xf32> to vector<1x4xf32>
    %62 = vector.shape_cast %61 : vector<1x4xf32> to vector<1x1x4xf32>
    %63 = vector.broadcast %62 : vector<1x1x4xf32> to vector<8x18x4xf32>
    %64 = arith.mulf %47, %63 : vector<8x18x4xf32>
    %65 = arith.addf %44, %64 : vector<8x18x4xf32>
    %66 = vector.extract_strided_slice %53 {offsets = [0, 0, 0], sizes = [8, 16, 4], strides = [1, 1, 1]} : vector<8x18x4xf32> to vector<8x16x4xf32>
    %67 = vector.extract_strided_slice %59 {offsets = [0, 1, 0], sizes = [8, 16, 4], strides = [1, 1, 1]} : vector<8x18x4xf32> to vector<8x16x4xf32>
    %68 = arith.addf %66, %67 : vector<8x16x4xf32>
    %69 = vector.extract_strided_slice %65 {offsets = [0, 2, 0], sizes = [8, 16, 4], strides = [1, 1, 1]} : vector<8x18x4xf32> to vector<8x16x4xf32>
    %70 = arith.addf %68, %69 : vector<8x16x4xf32>
    %71 = vector.shape_cast %70 : vector<8x16x4xf32> to vector<128x4xf32>
    %72 = arith.truncf %71 : vector<128x4xf32> to vector<128x4xbf16>
    %c0_35 = arith.constant 0 : index
    %c0_36 = arith.constant 0 : index
    %73 = vector.load %arg4[%c0_35, %c0_36] : memref<4x128xbf16, #tpu.memory_space<vmem>>, vector<4x128xbf16>
    %cst_37 = arith.constant dense<0.000000e+00> : vector<128x128xf32>
    %74 = tpu.matmul %72, %73, %cst_37 {dimension_numbers = #tpu.dot_dimension_numbers<[1], [0], [0], [1], [0, 0, 1, 1], [], []>} : vector<128x4xbf16>, vector<4x128xbf16>, vector<128x128xf32> -> vector<128x128xf32>
    %75 = arith.truncf %74 : vector<128x128xf32> to vector<128x128xbf16>
    %c0_38 = arith.constant 0 : index
    %c0_39 = arith.constant 0 : index
    %c0_40 = arith.constant 0 : index
    %76 = vector.load %arg5[%c0_38, %c0_39, %c0_40] : memref<1x128x128xbf16, #tpu.memory_space<vmem>>, vector<1x128x128xbf16>
    %77 = vector.shape_cast %76 : vector<1x128x128xbf16> to vector<128x128xbf16>
    %78 = vector.shape_cast %75 : vector<128x128xbf16> to vector<1x128x128xbf16>
    tpu.vector_store %arg5[%c0_38, %c0_39, %c0_40], %78 {strides = array<i32>} : memref<1x128x128xbf16, #tpu.memory_space<vmem>>, vector<1x128x128xbf16>,
    return
  }
  func.func @transform_0(%arg0: i32, %arg1: i32) -> (i32, i32, i32, i32, i32) {
    %c0_i32 = arith.constant 0 : i32
    %c0_i32_0 = arith.constant 0 : i32
    %c0_i32_1 = arith.constant 0 : i32
    %c0_i32_2 = arith.constant 0 : i32
    return %arg0, %arg1, %c0_i32, %c0_i32_0, %c0_i32_1 : i32, i32, i32, i32, i32
  }
  func.func @transform_1(%arg0: i32, %arg1: i32) -> (i32, i32, i32) {
    %c0_i32 = arith.constant 0 : i32
    %c0_i32_0 = arith.constant 0 : i32
    %c0_i32_1 = arith.constant 0 : i32
    %c0_i32_2 = arith.constant 0 : i32
    return %c0_i32, %c0_i32_0, %c0_i32_1 : i32, i32, i32
  }
  func.func @transform_2(%arg0: i32, %arg1: i32) -> (i32, i32) {
    %c0_i32 = arith.constant 0 : i32
    %c0_i32_0 = arith.constant 0 : i32
    %c0_i32_1 = arith.constant 0 : i32
    return %c0_i32, %c0_i32_0 : i32, i32
  }
  func.func @transform_3(%arg0: i32, %arg1: i32) -> (i32, i32, i32) {
    %c0_i32 = arith.constant 0 : i32
    %c0_i32_0 = arith.constant 0 : i32
    return %arg0, %arg1, %c0_i32 : i32, i32, i32
  }
}

</mosaic_0001>

<llo_original>
// kernel: tpu_custom_call.1
$region0: #{tpu_custom_call.1}
  #allocation0 [shape = 'u32[]', space=smem, size = 0x4, offset = 0x4, fixed_abs, tag = 'smem constant byte address 0x4 - core index']
  #allocation1 [shape = 'u32[72,128]{1,0:T(1,128)}', space=vmem, size = 0x9000, scoped, tag = 'internal scratch']
  %s0 = inlined_call_operand.vmem [shape: bf16[2,2,10,18,4], index: 0, kind: input, shape index: {}]
  %s1 = inlined_call_operand.vmem [shape: f32[9,1,4], index: 1, kind: input, shape index: {}]
  %s2 = inlined_call_operand.vmem [shape: bf16[4,128], index: 2, kind: input, shape index: {}]
  %s3 = inlined_call_operand.hbm [shape: bf16[2,256,128], index: 3, kind: output, shape index: {}]
  %s4 = sld [smem:[#allocation0]]
  $region45: #{tpu_custom_call.1} parent=0
    _
  %s6 = ssub.s32 1, %s4
  %s7 = scalar_select 0, %s6, %s4
  $region1: #{tpu_custom_call.1} parent=0
    #allocation2 [shape = 'u8[65536]{0}', space=vmem, size = 0x10000, scoped, tag = 'output window, operand 0']
    #allocation3 [shape = 's32[2]{0}', space=sflag, size = 0x8, scoped, tag = 'scoped memory for tpu_custom_call.1']
    %8 = vsyncpa [#allocation3], 0
    %s9 = scalar_lea.sflag [#allocation3], 1
    %10 = vsyncpa %s9, 0
    loop: start=0, step=1, limit=6
    $region2: #{tpu_custom_call.1} parent=1 // loop_pre_header
      _
    $region3: #{tpu_custom_call.1} parent=1 // loop_header
      %s12 = sphi 0, %s16
      %p13 = scmp.ge.s32.totalorder %s12, 6
      %s19 = sphi 0, %s31
      %s20 = sphi 0, %s27
      %s21 = sphi 0, %s19
      %s22 = sphi 0, %s20
      %s23 = sphi 0, %s21
      %s24 = sphi 0, %s22
      %s36 = sphi 0, %s38
      %s39 = sphi 0, %s36
      %s40 = sphi 0, %s39
      %s56 = sphi 0, %s40
      %s60 = sphi 0, %s60
      %s62 = sphi 0, %s60
      %s63 = sphi 0, %s62
      %s77 = sphi 0, %s63
      %s81 = sphi 0, %s81
      %s83 = sphi 0, %s81
      %s84 = sphi 0, %s83
      %s98 = sphi 0, %s84
      %s106 = sphi 0, %s108
      %s109 = sphi 0, %s106
      %s110 = sphi 0, %s109
      %s126 = sphi 0, %s110
    $region4: #{tpu_custom_call.1} parent=1 // loop_header_branch
      %15 = sbr.rel (%p13) target = $region8
    $region5: #{tpu_custom_call.1} parent=1 // loop_body
      %s17 = ssub.s32 %s12, 1
      %s18 = ssub.s32 %s12, 2
      %s25 = sadd.s32 1, %s20
      %p26 = scmp.ge.s32.totalorder %s25, 2
      %s27 = scalar_select %p26, 0, %s25
      %s28 = sadd.s32 1, %s19
      %s29 = scalar_select %p26, %s28, %s19
      %p30 = scmp.ge.s32.totalorder %s29, 2
      %s31 = scalar_select %p30, 0, %s29
      %s32 = ssub.s32 %s19, %s31
      %s33 = ssub.s32 %s20, %s27
      %s34 = sor.u32 %s32, %s33
      %p35 = scmp.eq.s32.totalorder %s34, 0
      %s37 = sadd.s32 %s36, 1
      %s38 = scalar_select %p35, %s36, %s37
      %p41 = pneg %p35
      %p42 = scmp.eq.s32.totalorder %s12, 3
      %p43 = por %p41, %p42
      %p44 = scmp.ne.s32.totalorder %s36, %s39
      %p45 = scmp.eq.s32.totalorder %s12, 0
      %p46 = por %p44, %p45
      %p47 = scmp.ne.s32.totalorder %s36, %s39
      %p48 = scmp.eq.s32.totalorder %s17, 3
      %p49 = por %p47, %p48
      %p50 = scmp.ne.s32.totalorder %s39, %s40
      %p51 = scmp.eq.s32.totalorder %s17, 0
      %p52 = por %p50, %p51
      %p53 = scmp.ne.s32.totalorder %s39, %s40
      %p54 = scmp.eq.s32.totalorder %s18, 3
      %p55 = por %p53, %p54
      %p57 = scmp.ne.s32.totalorder %s40, %s56
      %p58 = scmp.eq.s32.totalorder %s18, 0
      %p59 = por %p57, %p58
      %s61 = sadd.s32 %s60, 1
      %p64 = scmp.eq.s32.totalorder %s12, 3
      %p65 = scmp.ne.s32.totalorder %s60, %s62
      %p66 = scmp.eq.s32.totalorder %s12, 0
      %p67 = por %p65, %p66
      %p68 = scmp.ne.s32.totalorder %s60, %s62
      %p69 = scmp.eq.s32.totalorder %s17, 3
      %p70 = por %p68, %p69
      %p71 = scmp.ne.s32.totalorder %s62, %s63
      %p72 = scmp.eq.s32.totalorder %s17, 0
      %p73 = por %p71, %p72
      %p74 = scmp.ne.s32.totalorder %s62, %s63
      %p75 = scmp.eq.s32.totalorder %s18, 3
      %p76 = por %p74, %p75
      %p78 = scmp.ne.s32.totalorder %s63, %s77
      %p79 = scmp.eq.s32.totalorder %s18, 0
      %p80 = por %p78, %p79
      %s82 = sadd.s32 %s81, 1
      %p85 = scmp.eq.s32.totalorder %s12, 3
      %p86 = scmp.ne.s32.totalorder %s81, %s83
      %p87 = scmp.eq.s32.totalorder %s12, 0
      %p88 = por %p86, %p87
      %p89 = scmp.ne.s32.totalorder %s81, %s83
      %p90 = scmp.eq.s32.totalorder %s17, 3
      %p91 = por %p89, %p90
      %p92 = scmp.ne.s32.totalorder %s83, %s84
      %p93 = scmp.eq.s32.totalorder %s17, 0
      %p94 = por %p92, %p93
      %p95 = scmp.ne.s32.totalorder %s83, %s84
      %p96 = scmp.eq.s32.totalorder %s18, 3
      %p97 = por %p95, %p96
      %p99 = scmp.ne.s32.totalorder %s84, %s98
      %p100 = scmp.eq.s32.totalorder %s18, 0
      %p101 = por %p99, %p100
      %s102 = ssub.s32 %s19, %s31
      %s103 = ssub.s32 %s20, %s27
      %s104 = sor.u32 %s102, %s103
      %p105 = scmp.eq.s32.totalorder %s104, 0
      %s107 = sadd.s32 %s106, 1
      %s108 = scalar_select %p105, %s106, %s107
      %p111 = pneg %p105
      %p112 = scmp.eq.s32.totalorder %s12, 3
      %p113 = por %p111, %p112
      %p114 = scmp.ne.s32.totalorder %s106, %s109
      %p115 = scmp.eq.s32.totalorder %s12, 0
      %p116 = por %p114, %p115
      %p117 = scmp.ne.s32.totalorder %s106, %s109
      %p118 = scmp.eq.s32.totalorder %s17, 3
      %p119 = por %p117, %p118
      %p120 = scmp.ne.s32.totalorder %s109, %s110
      %p121 = scmp.eq.s32.totalorder %s17, 0
      %p122 = por %p120, %p121
      %p123 = scmp.ne.s32.totalorder %s109, %s110
      %p124 = scmp.eq.s32.totalorder %s18, 3
      %p125 = por %p123, %p124
      %p127 = scmp.ne.s32.totalorder %s110, %s126
      %p128 = scmp.eq.s32.totalorder %s18, 0
      %p129 = por %p127, %p128
      %p130 = scmp.le.s32.totalorder 1, %s12
      %p131 = scmp.lt.s32.totalorder %s12, 5
      %p132 = pnand %p130, %p131
      %p133 = pneg %p132
      // Predicated region
      $region9: #{tpu_custom_call.1} parent=5 // pred_check
        _
      $region10: #{tpu_custom_call.1} parent=5 // pred_check_branch
        %135 = sbr.rel (%p132) target = $region12
      $region11: #{tpu_custom_call.1} parent=5 // pred_region
        %s136 = ssub.s32 %s12, 1
        // Predicated region
        $region13: #{tpu_custom_call.1} parent=11 // pred_check
          %p137 = pneg %p73
        $region14: #{tpu_custom_call.1} parent=11 // pred_check_branch
          %139 = sbr.rel (%p137) target = $region16
        $region15: #{tpu_custom_call.1} parent=11 // pred_region
          _
        $region16: #{tpu_custom_call.1} parent=11 // pred_fallthru
          _
        // Predicated region
        $region17: #{tpu_custom_call.1} parent=11 // pred_check
          %p140 = pneg %p94
        $region18: #{tpu_custom_call.1} parent=11 // pred_check_branch
          %142 = sbr.rel (%p140) target = $region20
        $region19: #{tpu_custom_call.1} parent=11 // pred_region
          _
        $region20: #{tpu_custom_call.1} parent=11 // pred_fallthru
          _
      $region12: #{tpu_custom_call.1} parent=5 // pred_fallthru
        _
      %p143 = scmp.lt.s32.totalorder %s12, 4
      // Predicated region
      $region21: #{tpu_custom_call.1} parent=5 // pred_check
        %p144 = pneg %p143
      $region22: #{tpu_custom_call.1} parent=5 // pred_check_branch
        %146 = sbr.rel (%p144) target = $region24
      $region23: #{tpu_custom_call.1} parent=5 // pred_region
        // Predicated region
        $region25: #{tpu_custom_call.1} parent=23 // pred_check
          %p147 = pneg %p46
        $region26: #{tpu_custom_call.1} parent=23 // pred_check_branch
          %149 = sbr.rel (%p147) target = $region28
        $region27: #{tpu_custom_call.1} parent=23 // pred_region
          %p150 = scmp.lt.s32.totalorder %s19, 1
          %s151 = scalar_select %p150, %s19, 1
          %p152 = scmp.lt.s32.totalorder %s20, 1
          %s153 = scalar_select %p152, %s20, 1
          %s154 = smul.addr %s153, 30
          %s155 = smul.addr %s151, 60
          %s156 = sadd.s32 %s154, %s155
          %s157 = smul.addr %s156, 4
          %s158 = scalar_lea.vmem %s0, %s157
        $region28: #{tpu_custom_call.1} parent=23 // pred_fallthru
          _
      $region24: #{tpu_custom_call.1} parent=5 // pred_fallthru
        _
      %p159 = scmp.le.s32.totalorder 1, %s12
      %p160 = scmp.lt.s32.totalorder %s12, 5
      %p161 = pnand %p159, %p160
      %p162 = pneg %p161
      // Predicated region
      $region29: #{tpu_custom_call.1} parent=5 // pred_check
        _
      $region30: #{tpu_custom_call.1} parent=5 // pred_check_branch
        %164 = sbr.rel (%p161) target = $region32
      $region31: #{tpu_custom_call.1} parent=5 // pred_region
        %s165 = ssub.s32 %s12, 1
        %p166 = scmp.lt.s32.totalorder %s21, 1
        %s167 = scalar_select %p166, %s21, 1
        %p168 = scmp.lt.s32.totalorder %s22, 1
        %s169 = scalar_select %p168, %s22, 1
        %s170 = smul.addr %s169, 30
        %s171 = smul.addr %s167, 60
        %s172 = sadd.s32 %s170, %s171
        %s173 = smul.addr %s172, 4
        %s174 = scalar_lea.vmem %s0, %s173
        %p175 = pneg %p52
        %p176 = pneg %p49
        %p177 = pneg %p73
        %p178 = pneg %p70
        %p179 = pneg %p94
        %p180 = pneg %p91
        %p181 = pneg %p122
        %p182 = pneg %p119
        %s183 = sand.u32 %s109, 1
        %s184 = scalar_lea.sflag [#allocation3], %s183
        %s185 = sand.u32 %s109, 1
        %s186 = smul.addr %s185, 64
        %s187 = scalar_lea.vmem [#allocation2], %s186
        %p188 = scmp.lt.s32.totalorder %s21, 1
        %s189 = scalar_select %p188, %s21, 1
        %p190 = scmp.lt.s32.totalorder %s22, 1
        %s191 = scalar_select %p190, %s22, 1
        %s192 = smul.addr %s191, 30
        %s193 = smul.addr %s189, 60
        %s194 = sadd.s32 %s192, %s193
        %s195 = smul.addr %s194, 4
        %s196 = scalar_lea.vmem %s0, %s195
        %s197 = smul.u32 16, %s22
        %v199 = vld [vmem:[%s196] sm:$0xf]
        %v200 = vld [vmem:[%s196 + $0x4] sm:$0xf]
        %v201 = vld [vmem:[%s196 + $0x8] sm:$0x1]
        %v202 = vld [vmem:[%s196 + $0xc] sm:$0xf]
        %v203 = vld [vmem:[%s196 + $0x10] sm:$0xf]
        %v204 = vld [vmem:[%s196 + $0x14] sm:$0x1]
        %v205 = vld [vmem:[%s196 + $0x18] sm:$0xf]
        %v206 = vld [vmem:[%s196 + $0x1c] sm:$0xf]
        %v207 = vld [vmem:[%s196 + $0x20] sm:$0x1]
        %v208 = vld [vmem:[%s196 + $0x24] sm:$0xf]
        %v209 = vld [vmem:[%s196 + $0x28] sm:$0xf]
        %v210 = vld [vmem:[%s196 + $0x2c] sm:$0x1]
        %v211 = vld [vmem:[%s196 + $0x30] sm:$0xf]
        %v212 = vld [vmem:[%s196 + $0x34] sm:$0xf]
        %v213 = vld [vmem:[%s196 + $0x38] sm:$0x1]
        %v214 = vld [vmem:[%s196 + $0x3c] sm:$0xf]
        %v215 = vld [vmem:[%s196 + $0x40] sm:$0xf]
        %v216 = vld [vmem:[%s196 + $0x44] sm:$0x1]
        %v217 = vld [vmem:[%s196 + $0x48] sm:$0xf]
        %v218 = vld [vmem:[%s196 + $0x4c] sm:$0xf]
        %v219 = vld [vmem:[%s196 + $0x50] sm:$0x1]
        %v220 = vld [vmem:[%s196 + $0x54] sm:$0xf]
        %v221 = vld [vmem:[%s196 + $0x58] sm:$0xf]
        %v222 = vld [vmem:[%s196 + $0x5c] sm:$0x1]
        %v223 = vunpack.c.l.bf16 %v199
        %v224 = vunpack.c.l.bf16 %v200
        %v225 = vunpack.c.l.bf16 %v201
        %v226 = vunpack.c.l.bf16 %v202
        %v227 = vunpack.c.l.bf16 %v203
        %v228 = vunpack.c.l.bf16 %v204
        %v229 = vunpack.c.l.bf16 %v205
        %v230 = vunpack.c.l.bf16 %v206
        %v231 = vunpack.c.l.bf16 %v207
        %v232 = vunpack.c.l.bf16 %v208
        %v233 = vunpack.c.l.bf16 %v209
        %v234 = vunpack.c.l.bf16 %v210
        %v235 = vunpack.c.l.bf16 %v211
        %v236 = vunpack.c.l.bf16 %v212
        %v237 = vunpack.c.l.bf16 %v213
        %v238 = vunpack.c.l.bf16 %v214
        %v239 = vunpack.c.l.bf16 %v215
        %v240 = vunpack.c.l.bf16 %v216
        %v241 = vunpack.c.l.bf16 %v217
        %v242 = vunpack.c.l.bf16 %v218
        %v243 = vunpack.c.l.bf16 %v219
        %v244 = vunpack.c.l.bf16 %v220
        %v245 = vunpack.c.l.bf16 %v221
        %v246 = vunpack.c.l.bf16 %v222
        %v247 = vld [vmem:[%s1] sm:$0x1]
        %v249 = vperm.slane %v247, 0
        %v251 = vmul.f32 %v223, %v249
        %v252 = vmul.f32 %v224, %v249
        %v253 = vmul.f32 %v226, %v249
        %v254 = vmul.f32 %v227, %v249
        %v255 = vmul.f32 %v229, %v249
        %v256 = vmul.f32 %v230, %v249
        %v257 = vmul.f32 %v232, %v249
        %v258 = vmul.f32 %v233, %v249
        %v259 = vmul.f32 %v235, %v249
        %v260 = vmul.f32 %v236, %v249
        %v261 = vmul.f32 %v238, %v249
        %v262 = vmul.f32 %v239, %v249
        %v263 = vmul.f32 %v241, %v249
        %v264 = vmul.f32 %v242, %v249
        %v265 = vmul.f32 %v244, %v249
        %v266 = vmul.f32 %v245, %v249
        %v267 = vadd.f32 %v251, 0.0
        %v268 = vadd.f32 %v252, 0.0
        %v269 = vadd.f32 %v253, 0.0
        %v270 = vadd.f32 %v254, 0.0
        %v271 = vadd.f32 %v255, 0.0
        %v272 = vadd.f32 %v256, 0.0
        %v273 = vadd.f32 %v257, 0.0
        %v274 = vadd.f32 %v258, 0.0
        %v275 = vadd.f32 %v259, 0.0
        %v276 = vadd.f32 %v260, 0.0
        %v277 = vadd.f32 %v261, 0.0
        %v278 = vadd.f32 %v262, 0.0
        %v279 = vadd.f32 %v263, 0.0
        %v280 = vadd.f32 %v264, 0.0
        %v281 = vadd.f32 %v265, 0.0
        %v282 = vadd.f32 %v266, 0.0
        %s283 = scalar_lea.vmem %s1, 1
        %v284 = vld [vmem:[%s283] sm:$0x1]
        %v286 = vperm.slane %v284, 0
        %v288 = vmul.f32 %v223, %v286
        %v289 = vmul.f32 %v224, %v286
        %v290 = vmul.f32 %v225, %v286
        %v291 = vmul.f32 %v226, %v286
        %v292 = vmul.f32 %v227, %v286
        %v293 = vmul.f32 %v228, %v286
        %v294 = vmul.f32 %v229, %v286
        %v295 = vmul.f32 %v230, %v286
        %v296 = vmul.f32 %v231, %v286
        %v297 = vmul.f32 %v232, %v286
        %v298 = vmul.f32 %v233, %v286
        %v299 = vmul.f32 %v234, %v286
        %v300 = vmul.f32 %v235, %v286
        %v301 = vmul.f32 %v236, %v286
        %v302 = vmul.f32 %v237, %v286
        %v303 = vmul.f32 %v238, %v286
        %v304 = vmul.f32 %v239, %v286
        %v305 = vmul.f32 %v240, %v286
        %v306 = vmul.f32 %v241, %v286
        %v307 = vmul.f32 %v242, %v286
        %v308 = vmul.f32 %v243, %v286
        %v309 = vmul.f32 %v244, %v286
        %v310 = vmul.f32 %v245, %v286
        %v311 = vmul.f32 %v246, %v286
        %v312 = vadd.f32 %v288, 0.0
        %v313 = vadd.f32 %v289, 0.0
        %v314 = vadd.f32 %v290, 0.0
        %v315 = vadd.f32 %v291, 0.0
        %v316 = vadd.f32 %v292, 0.0
        %v317 = vadd.f32 %v293, 0.0
        %v318 = vadd.f32 %v294, 0.0
        %v319 = vadd.f32 %v295, 0.0
        %v320 = vadd.f32 %v296, 0.0
        %v321 = vadd.f32 %v297, 0.0
        %v322 = vadd.f32 %v298, 0.0
        %v323 = vadd.f32 %v299, 0.0
        %v324 = vadd.f32 %v300, 0.0
        %v325 = vadd.f32 %v301, 0.0
        %v326 = vadd.f32 %v302, 0.0
        %v327 = vadd.f32 %v303, 0.0
        %v328 = vadd.f32 %v304, 0.0
        %v329 = vadd.f32 %v305, 0.0
        %v330 = vadd.f32 %v306, 0.0
        %v331 = vadd.f32 %v307, 0.0
        %v332 = vadd.f32 %v308, 0.0
        %v333 = vadd.f32 %v309, 0.0
        %v334 = vadd.f32 %v310, 0.0
        %v335 = vadd.f32 %v311, 0.0
        %s336 = scalar_lea.vmem %s1, 2
        %v337 = vld [vmem:[%s336] sm:$0x1]
        %v339 = vperm.slane %v337, 0
        %v341 = vmul.f32 %v223, %v339
        %v342 = vmul.f32 %v224, %v339
        %v343 = vmul.f32 %v225, %v339
        %v344 = vmul.f32 %v226, %v339
        %v345 = vmul.f32 %v227, %v339
        %v346 = vmul.f32 %v228, %v339
        %v347 = vmul.f32 %v229, %v339
        %v348 = vmul.f32 %v230, %v339
        %v349 = vmul.f32 %v231, %v339
        %v350 = vmul.f32 %v232, %v339
        %v351 = vmul.f32 %v233, %v339
        %v352 = vmul.f32 %v234, %v339
        %v353 = vmul.f32 %v235, %v339
        %v354 = vmul.f32 %v236, %v339
        %v355 = vmul.f32 %v237, %v339
        %v356 = vmul.f32 %v238, %v339
        %v357 = vmul.f32 %v239, %v339
        %v358 = vmul.f32 %v240, %v339
        %v359 = vmul.f32 %v241, %v339
        %v360 = vmul.f32 %v242, %v339
        %v361 = vmul.f32 %v243, %v339
        %v362 = vmul.f32 %v244, %v339
        %v363 = vmul.f32 %v245, %v339
        %v364 = vmul.f32 %v246, %v339
        %v365 = vadd.f32 %v341, 0.0
        %v366 = vadd.f32 %v342, 0.0
        %v367 = vadd.f32 %v343, 0.0
        %v368 = vadd.f32 %v344, 0.0
        %v369 = vadd.f32 %v345, 0.0
        %v370 = vadd.f32 %v346, 0.0
        %v371 = vadd.f32 %v347, 0.0
        %v372 = vadd.f32 %v348, 0.0
        %v373 = vadd.f32 %v349, 0.0
        %v374 = vadd.f32 %v350, 0.0
        %v375 = vadd.f32 %v351, 0.0
        %v376 = vadd.f32 %v352, 0.0
        %v377 = vadd.f32 %v353, 0.0
        %v378 = vadd.f32 %v354, 0.0
        %v379 = vadd.f32 %v355, 0.0
        %v380 = vadd.f32 %v356, 0.0
        %v381 = vadd.f32 %v357, 0.0
        %v382 = vadd.f32 %v358, 0.0
        %v383 = vadd.f32 %v359, 0.0
        %v384 = vadd.f32 %v360, 0.0
        %v385 = vadd.f32 %v361, 0.0
        %v386 = vadd.f32 %v362, 0.0
        %v387 = vadd.f32 %v363, 0.0
        %v388 = vadd.f32 %v364, 0.0
        %s389 = scalar_lea.vmem %s196, 12
        %v390 = vld [vmem:[%s389] sm:$0xf]
        %v391 = vld [vmem:[%s389 + $0x4] sm:$0xf]
        %v392 = vld [vmem:[%s389 + $0x8] sm:$0x1]
        %v393 = vld [vmem:[%s389 + $0xc] sm:$0xf]
        %v394 = vld [vmem:[%s389 + $0x10] sm:$0xf]
        %v395 = vld [vmem:[%s389 + $0x14] sm:$0x1]
        %v396 = vld [vmem:[%s389 + $0x18] sm:$0xf]
        %v397 = vld [vmem:[%s389 + $0x1c] sm:$0xf]
        %v398 = vld [vmem:[%s389 + $0x20] sm:$0x1]
        %v399 = vld [vmem:[%s389 + $0x24] sm:$0xf]
        %v400 = vld [vmem:[%s389 + $0x28] sm:$0xf]
        %v401 = vld [vmem:[%s389 + $0x2c] sm:$0x1]
        %v402 = vld [vmem:[%s389 + $0x30] sm:$0xf]
        %v403 = vld [vmem:[%s389 + $0x34] sm:$0xf]
        %v404 = vld [vmem:[%s389 + $0x38] sm:$0x1]
        %v405 = vld [vmem:[%s389 + $0x3c] sm:$0xf]
        %v406 = vld [vmem:[%s389 + $0x40] sm:$0xf]
        %v407 = vld [vmem:[%s389 + $0x44] sm:$0x1]
        %v408 = vld [vmem:[%s389 + $0x48] sm:$0xf]
        %v409 = vld [vmem:[%s389 + $0x4c] sm:$0xf]
        %v410 = vld [vmem:[%s389 + $0x50] sm:$0x1]
        %v411 = vld [vmem:[%s389 + $0x54] sm:$0xf]
        %v412 = vld [vmem:[%s389 + $0x58] sm:$0xf]
        %v413 = vld [vmem:[%s389 + $0x5c] sm:$0x1]
        %v414 = vunpack.c.l.bf16 %v390
        %v415 = vunpack.c.l.bf16 %v391
        %v416 = vunpack.c.l.bf16 %v392
        %v417 = vunpack.c.l.bf16 %v393
        %v418 = vunpack.c.l.bf16 %v394
        %v419 = vunpack.c.l.bf16 %v395
        %v420 = vunpack.c.l.bf16 %v396
        %v421 = vunpack.c.l.bf16 %v397
        %v422 = vunpack.c.l.bf16 %v398
        %v423 = vunpack.c.l.bf16 %v399
        %v424 = vunpack.c.l.bf16 %v400
        %v425 = vunpack.c.l.bf16 %v401
        %v426 = vunpack.c.l.bf16 %v402
        %v427 = vunpack.c.l.bf16 %v403
        %v428 = vunpack.c.l.bf16 %v404
        %v429 = vunpack.c.l.bf16 %v405
        %v430 = vunpack.c.l.bf16 %v406
        %v431 = vunpack.c.l.bf16 %v407
        %v432 = vunpack.c.l.bf16 %v408
        %v433 = vunpack.c.l.bf16 %v409
        %v434 = vunpack.c.l.bf16 %v410
        %v435 = vunpack.c.l.bf16 %v411
        %v436 = vunpack.c.l.bf16 %v412
        %v437 = vunpack.c.l.bf16 %v413
        %s438 = scalar_lea.vmem %s1, 3
        %v439 = vld [vmem:[%s438] sm:$0x1]
        %v441 = vperm.slane %v439, 0
        %v443 = vmul.f32 %v414, %v441
        %v444 = vmul.f32 %v415, %v441
        %v445 = vmul.f32 %v417, %v441
        %v446 = vmul.f32 %v418, %v441
        %v447 = vmul.f32 %v420, %v441
        %v448 = vmul.f32 %v421, %v441
        %v449 = vmul.f32 %v423, %v441
        %v450 = vmul.f32 %v424, %v441
        %v451 = vmul.f32 %v426, %v441
        %v452 = vmul.f32 %v427, %v441
        %v453 = vmul.f32 %v429, %v441
        %v454 = vmul.f32 %v430, %v441
        %v455 = vmul.f32 %v432, %v441
        %v456 = vmul.f32 %v433, %v441
        %v457 = vmul.f32 %v435, %v441
        %v458 = vmul.f32 %v436, %v441
        %v459 = vadd.f32 %v267, %v443
        %v460 = vadd.f32 %v268, %v444
        %v461 = vadd.f32 %v269, %v445
        %v462 = vadd.f32 %v270, %v446
        %v463 = vadd.f32 %v271, %v447
        %v464 = vadd.f32 %v272, %v448
        %v465 = vadd.f32 %v273, %v449
        %v466 = vadd.f32 %v274, %v450
        %v467 = vadd.f32 %v275, %v451
        %v468 = vadd.f32 %v276, %v452
        %v469 = vadd.f32 %v277, %v453
        %v470 = vadd.f32 %v278, %v454
        %v471 = vadd.f32 %v279, %v455
        %v472 = vadd.f32 %v280, %v456
        %v473 = vadd.f32 %v281, %v457
        %v474 = vadd.f32 %v282, %v458
        %s475 = scalar_lea.vmem %s1, 4
        %v476 = vld [vmem:[%s475] sm:$0x1]
        %v478 = vperm.slane %v476, 0
        %v480 = vmul.f32 %v414, %v478
        %v481 = vmul.f32 %v415, %v478
        %v482 = vmul.f32 %v416, %v478
        %v483 = vmul.f32 %v417, %v478
        %v484 = vmul.f32 %v418, %v478
        %v485 = vmul.f32 %v419, %v478
        %v486 = vmul.f32 %v420, %v478
        %v487 = vmul.f32 %v421, %v478
        %v488 = vmul.f32 %v422, %v478
        %v489 = vmul.f32 %v423, %v478
        %v490 = vmul.f32 %v424, %v478
        %v491 = vmul.f32 %v425, %v478
        %v492 = vmul.f32 %v426, %v478
        %v493 = vmul.f32 %v427, %v478
        %v494 = vmul.f32 %v428, %v478
        %v495 = vmul.f32 %v429, %v478
        %v496 = vmul.f32 %v430, %v478
        %v497 = vmul.f32 %v431, %v478
        %v498 = vmul.f32 %v432, %v478
        %v499 = vmul.f32 %v433, %v478
        %v500 = vmul.f32 %v434, %v478
        %v501 = vmul.f32 %v435, %v478
        %v502 = vmul.f32 %v436, %v478
        %v503 = vmul.f32 %v437, %v478
        %v504 = vadd.f32 %v312, %v480
        %v505 = vadd.f32 %v313, %v481
        %v506 = vadd.f32 %v314, %v482
        %v507 = vadd.f32 %v315, %v483
        %v508 = vadd.f32 %v316, %v484
        %v509 = vadd.f32 %v317, %v485
        %v510 = vadd.f32 %v318, %v486
        %v511 = vadd.f32 %v319, %v487
        %v512 = vadd.f32 %v320, %v488
        %v513 = vadd.f32 %v321, %v489
        %v514 = vadd.f32 %v322, %v490
        %v515 = vadd.f32 %v323, %v491
        %v516 = vadd.f32 %v324, %v492
        %v517 = vadd.f32 %v325, %v493
        %v518 = vadd.f32 %v326, %v494
        %v519 = vadd.f32 %v327, %v495
        %v520 = vadd.f32 %v328, %v496
        %v521 = vadd.f32 %v329, %v497
        %v522 = vadd.f32 %v330, %v498
        %v523 = vadd.f32 %v331, %v499
        %v524 = vadd.f32 %v332, %v500
        %v525 = vadd.f32 %v333, %v501
        %v526 = vadd.f32 %v334, %v502
        %v527 = vadd.f32 %v335, %v503
        %s528 = scalar_lea.vmem %s1, 5
        %v529 = vld [vmem:[%s528] sm:$0x1]
        %v531 = vperm.slane %v529, 0
        %v533 = vmul.f32 %v414, %v531
        %v534 = vmul.f32 %v415, %v531
        %v535 = vmul.f32 %v416, %v531
        %v536 = vmul.f32 %v417, %v531
        %v537 = vmul.f32 %v418, %v531
        %v538 = vmul.f32 %v419, %v531
        %v539 = vmul.f32 %v420, %v531
        %v540 = vmul.f32 %v421, %v531
        %v541 = vmul.f32 %v422, %v531
        %v542 = vmul.f32 %v423, %v531
        %v543 = vmul.f32 %v424, %v531
        %v544 = vmul.f32 %v425, %v531
        %v545 = vmul.f32 %v426, %v531
        %v546 = vmul.f32 %v427, %v531
        %v547 = vmul.f32 %v428, %v531
        %v548 = vmul.f32 %v429, %v531
        %v549 = vmul.f32 %v430, %v531
        %v550 = vmul.f32 %v431, %v531
        %v551 = vmul.f32 %v432, %v531
        %v552 = vmul.f32 %v433, %v531
        %v553 = vmul.f32 %v434, %v531
        %v554 = vmul.f32 %v435, %v531
        %v555 = vmul.f32 %v436, %v531
        %v556 = vmul.f32 %v437, %v531
        %v557 = vadd.f32 %v365, %v533
        %v558 = vadd.f32 %v366, %v534
        %v559 = vadd.f32 %v367, %v535
        %v560 = vadd.f32 %v368, %v536
        %v561 = vadd.f32 %v369, %v537
        %v562 = vadd.f32 %v370, %v538
        %v563 = vadd.f32 %v371, %v539
        %v564 = vadd.f32 %v372, %v540
        %v565 = vadd.f32 %v373, %v541
        %v566 = vadd.f32 %v374, %v542
        %v567 = vadd.f32 %v375, %v543
        %v568 = vadd.f32 %v376, %v544
        %v569 = vadd.f32 %v377, %v545
        %v570 = vadd.f32 %v378, %v546
        %v571 = vadd.f32 %v379, %v547
        %v572 = vadd.f32 %v380, %v548
        %v573 = vadd.f32 %v381, %v549
        %v574 = vadd.f32 %v382, %v550
        %v575 = vadd.f32 %v383, %v551
        %v576 = vadd.f32 %v384, %v552
        %v577 = vadd.f32 %v385, %v553
        %v578 = vadd.f32 %v386, %v554
        %v579 = vadd.f32 %v387, %v555
        %v580 = vadd.f32 %v388, %v556
        %s581 = scalar_lea.vmem %s196, 24
        %v582 = vld [vmem:[%s581] sm:$0xf]
        %v583 = vld [vmem:[%s581 + $0x4] sm:$0xf]
        %v584 = vld [vmem:[%s581 + $0x8] sm:$0x1]
        %v585 = vld [vmem:[%s581 + $0xc] sm:$0xf]
        %v586 = vld [vmem:[%s581 + $0x10] sm:$0xf]
        %v587 = vld [vmem:[%s581 + $0x14] sm:$0x1]
        %v588 = vld [vmem:[%s581 + $0x18] sm:$0xf]
        %v589 = vld [vmem:[%s581 + $0x1c] sm:$0xf]
        %v590 = vld [vmem:[%s581 + $0x20] sm:$0x1]
        %v591 = vld [vmem:[%s581 + $0x24] sm:$0xf]
        %v592 = vld [vmem:[%s581 + $0x28] sm:$0xf]
        %v593 = vld [vmem:[%s581 + $0x2c] sm:$0x1]
        %v594 = vld [vmem:[%s581 + $0x30] sm:$0xf]
        %v595 = vld [vmem:[%s581 + $0x34] sm:$0xf]
        %v596 = vld [vmem:[%s581 + $0x38] sm:$0x1]
        %v597 = vld [vmem:[%s581 + $0x3c] sm:$0xf]
        %v598 = vld [vmem:[%s581 + $0x40] sm:$0xf]
        %v599 = vld [vmem:[%s581 + $0x44] sm:$0x1]
        %v600 = vld [vmem:[%s581 + $0x48] sm:$0xf]
        %v601 = vld [vmem:[%s581 + $0x4c] sm:$0xf]
        %v602 = vld [vmem:[%s581 + $0x50] sm:$0x1]
        %v603 = vld [vmem:[%s581 + $0x54] sm:$0xf]
        %v604 = vld [vmem:[%s581 + $0x58] sm:$0xf]
        %v605 = vld [vmem:[%s581 + $0x5c] sm:$0x1]
        %v606 = vunpack.c.l.bf16 %v582
        %v607 = vunpack.c.l.bf16 %v583
        %v608 = vunpack.c.l.bf16 %v584
        %v609 = vunpack.c.l.bf16 %v585
        %v610 = vunpack.c.l.bf16 %v586
        %v611 = vunpack.c.l.bf16 %v587
        %v612 = vunpack.c.l.bf16 %v588
        %v613 = vunpack.c.l.bf16 %v589
        %v614 = vunpack.c.l.bf16 %v590
        %v615 = vunpack.c.l.bf16 %v591
        %v616 = vunpack.c.l.bf16 %v592
        %v617 = vunpack.c.l.bf16 %v593
        %v618 = vunpack.c.l.bf16 %v594
        %v619 = vunpack.c.l.bf16 %v595
        %v620 = vunpack.c.l.bf16 %v596
        %v621 = vunpack.c.l.bf16 %v597
        %v622 = vunpack.c.l.bf16 %v598
        %v623 = vunpack.c.l.bf16 %v599
        %v624 = vunpack.c.l.bf16 %v600
        %v625 = vunpack.c.l.bf16 %v601
        %v626 = vunpack.c.l.bf16 %v602
        %v627 = vunpack.c.l.bf16 %v603
        %v628 = vunpack.c.l.bf16 %v604
        %v629 = vunpack.c.l.bf16 %v605
        %s630 = scalar_lea.vmem %s1, 6
        %v631 = vld [vmem:[%s630] sm:$0x1]
        %v633 = vperm.slane %v631, 0
        %v635 = vmul.f32 %v606, %v633
        %v636 = vmul.f32 %v607, %v633
        %v637 = vmul.f32 %v609, %v633
        %v638 = vmul.f32 %v610, %v633
        %v639 = vmul.f32 %v612, %v633
        %v640 = vmul.f32 %v613, %v633
        %v641 = vmul.f32 %v615, %v633
        %v642 = vmul.f32 %v616, %v633
        %v643 = vmul.f32 %v618, %v633
        %v644 = vmul.f32 %v619, %v633
        %v645 = vmul.f32 %v621, %v633
        %v646 = vmul.f32 %v622, %v633
        %v647 = vmul.f32 %v624, %v633
        %v648 = vmul.f32 %v625, %v633
        %v649 = vmul.f32 %v627, %v633
        %v650 = vmul.f32 %v628, %v633
        %v651 = vadd.f32 %v459, %v635
        %v652 = vadd.f32 %v460, %v636
        %v653 = vadd.f32 %v461, %v637
        %v654 = vadd.f32 %v462, %v638
        %v655 = vadd.f32 %v463, %v639
        %v656 = vadd.f32 %v464, %v640
        %v657 = vadd.f32 %v465, %v641
        %v658 = vadd.f32 %v466, %v642
        %v659 = vadd.f32 %v467, %v643
        %v660 = vadd.f32 %v468, %v644
        %v661 = vadd.f32 %v469, %v645
        %v662 = vadd.f32 %v470, %v646
        %v663 = vadd.f32 %v471, %v647
        %v664 = vadd.f32 %v472, %v648
        %v665 = vadd.f32 %v473, %v649
        %v666 = vadd.f32 %v474, %v650
        %s667 = scalar_lea.vmem %s1, 7
        %v668 = vld [vmem:[%s667] sm:$0x1]
        %v670 = vperm.slane %v668, 0
        %v672 = vmul.f32 %v606, %v670
        %v673 = vmul.f32 %v607, %v670
        %v674 = vmul.f32 %v608, %v670
        %v675 = vmul.f32 %v609, %v670
        %v676 = vmul.f32 %v610, %v670
        %v677 = vmul.f32 %v611, %v670
        %v678 = vmul.f32 %v612, %v670
        %v679 = vmul.f32 %v613, %v670
        %v680 = vmul.f32 %v614, %v670
        %v681 = vmul.f32 %v615, %v670
        %v682 = vmul.f32 %v616, %v670
        %v683 = vmul.f32 %v617, %v670
        %v684 = vmul.f32 %v618, %v670
        %v685 = vmul.f32 %v619, %v670
        %v686 = vmul.f32 %v620, %v670
        %v687 = vmul.f32 %v621, %v670
        %v688 = vmul.f32 %v622, %v670
        %v689 = vmul.f32 %v623, %v670
        %v690 = vmul.f32 %v624, %v670
        %v691 = vmul.f32 %v625, %v670
        %v692 = vmul.f32 %v626, %v670
        %v693 = vmul.f32 %v627, %v670
        %v694 = vmul.f32 %v628, %v670
        %v695 = vmul.f32 %v629, %v670
        %v696 = vadd.f32 %v504, %v672
        %v697 = vadd.f32 %v505, %v673
        %v698 = vadd.f32 %v506, %v674
        %v699 = vadd.f32 %v507, %v675
        %v700 = vadd.f32 %v508, %v676
        %v701 = vadd.f32 %v509, %v677
        %v702 = vadd.f32 %v510, %v678
        %v703 = vadd.f32 %v511, %v679
        %v704 = vadd.f32 %v512, %v680
        %v705 = vadd.f32 %v513, %v681
        %v706 = vadd.f32 %v514, %v682
        %v707 = vadd.f32 %v515, %v683
        %v708 = vadd.f32 %v516, %v684
        %v709 = vadd.f32 %v517, %v685
        %v710 = vadd.f32 %v518, %v686
        %v711 = vadd.f32 %v519, %v687
        %v712 = vadd.f32 %v520, %v688
        %v713 = vadd.f32 %v521, %v689
        %v714 = vadd.f32 %v522, %v690
        %v715 = vadd.f32 %v523, %v691
        %v716 = vadd.f32 %v524, %v692
        %v717 = vadd.f32 %v525, %v693
        %v718 = vadd.f32 %v526, %v694
        %v719 = vadd.f32 %v527, %v695
        %s720 = scalar_lea.vmem %s1, 8
        %v721 = vld [vmem:[%s720] sm:$0x1]
        %v723 = vperm.slane %v721, 0
        %v725 = vmul.f32 %v606, %v723
        %v726 = vmul.f32 %v607, %v723
        %v727 = vmul.f32 %v608, %v723
        %v728 = vmul.f32 %v609, %v723
        %v729 = vmul.f32 %v610, %v723
        %v730 = vmul.f32 %v611, %v723
        %v731 = vmul.f32 %v612, %v723
        %v732 = vmul.f32 %v613, %v723
        %v733 = vmul.f32 %v614, %v723
        %v734 = vmul.f32 %v615, %v723
        %v735 = vmul.f32 %v616, %v723
        %v736 = vmul.f32 %v617, %v723
        %v737 = vmul.f32 %v618, %v723
        %v738 = vmul.f32 %v619, %v723
        %v739 = vmul.f32 %v620, %v723
        %v740 = vmul.f32 %v621, %v723
        %v741 = vmul.f32 %v622, %v723
        %v742 = vmul.f32 %v623, %v723
        %v743 = vmul.f32 %v624, %v723
        %v744 = vmul.f32 %v625, %v723
        %v745 = vmul.f32 %v626, %v723
        %v746 = vmul.f32 %v627, %v723
        %v747 = vmul.f32 %v628, %v723
        %v748 = vmul.f32 %v629, %v723
        %v749 = vadd.f32 %v557, %v725
        %v750 = vadd.f32 %v558, %v726
        %v751 = vadd.f32 %v559, %v727
        %v752 = vadd.f32 %v560, %v728
        %v753 = vadd.f32 %v561, %v729
        %v754 = vadd.f32 %v562, %v730
        %v755 = vadd.f32 %v563, %v731
        %v756 = vadd.f32 %v564, %v732
        %v757 = vadd.f32 %v565, %v733
        %v758 = vadd.f32 %v566, %v734
        %v759 = vadd.f32 %v567, %v735
        %v760 = vadd.f32 %v568, %v736
        %v761 = vadd.f32 %v569, %v737
        %v762 = vadd.f32 %v570, %v738
        %v763 = vadd.f32 %v571, %v739
        %v764 = vadd.f32 %v572, %v740
        %v765 = vadd.f32 %v573, %v741
        %v766 = vadd.f32 %v574, %v742
        %v767 = vadd.f32 %v575, %v743
        %v768 = vadd.f32 %v576, %v744
        %v769 = vadd.f32 %v577, %v745
        %v770 = vadd.f32 %v578, %v746
        %v771 = vadd.f32 %v579, %v747
        %v772 = vadd.f32 %v580, %v748
        %vm797 = vcmask 1046528
        %v798 = vrot.slane %v696, 1
        %v799 = vrot.slane %v697, 1
        %v800 = vsel %vm797, %v798, %v799
        %v801 = vrot.slane %v698, 1
        %v802 = vsel %vm797, %v799, %v801
        %v803 = vrot.slane %v699, 1
        %v804 = vrot.slane %v700, 1
        %v805 = vsel %vm797, %v803, %v804
        %v806 = vrot.slane %v701, 1
        %v807 = vsel %vm797, %v804, %v806
        %v808 = vrot.slane %v702, 1
        %v809 = vrot.slane %v703, 1
        %v810 = vsel %vm797, %v808, %v809
        %v811 = vrot.slane %v704, 1
        %v812 = vsel %vm797, %v809, %v811
        %v813 = vrot.slane %v705, 1
        %v814 = vrot.slane %v706, 1
        %v815 = vsel %vm797, %v813, %v814
        %v816 = vrot.slane %v707, 1
        %v817 = vsel %vm797, %v814, %v816
        %v818 = vrot.slane %v708, 1
        %v819 = vrot.slane %v709, 1
        %v820 = vsel %vm797, %v818, %v819
        %v821 = vrot.slane %v710, 1
        %v822 = vsel %vm797, %v819, %v821
        %v823 = vrot.slane %v711, 1
        %v824 = vrot.slane %v712, 1
        %v825 = vsel %vm797, %v823, %v824
        %v826 = vrot.slane %v713, 1
        %v827 = vsel %vm797, %v824, %v826
        %v828 = vrot.slane %v714, 1
        %v829 = vrot.slane %v715, 1
        %v830 = vsel %vm797, %v828, %v829
        %v831 = vrot.slane %v716, 1
        %v832 = vsel %vm797, %v829, %v831
        %v833 = vrot.slane %v717, 1
        %v834 = vrot.slane %v718, 1
        %v835 = vsel %vm797, %v833, %v834
        %v836 = vrot.slane %v719, 1
        %v837 = vsel %vm797, %v834, %v836
        %v854 = vadd.f32 %v651, %v800
        %v855 = vadd.f32 %v652, %v802
        %v856 = vadd.f32 %v653, %v805
        %v857 = vadd.f32 %v654, %v807
        %v858 = vadd.f32 %v655, %v810
        %v859 = vadd.f32 %v656, %v812
        %v860 = vadd.f32 %v657, %v815
        %v861 = vadd.f32 %v658, %v817
        %v862 = vadd.f32 %v659, %v820
        %v863 = vadd.f32 %v660, %v822
        %v864 = vadd.f32 %v661, %v825
        %v865 = vadd.f32 %v662, %v827
        %v866 = vadd.f32 %v663, %v830
        %v867 = vadd.f32 %v664, %v832
        %v868 = vadd.f32 %v665, %v835
        %v869 = vadd.f32 %v666, %v837
        %vm894 = vcmask 1045504
        %v895 = vrot.slane %v749, 2
        %v896 = vrot.slane %v750, 2
        %v897 = vsel %vm894, %v895, %v896
        %v898 = vrot.slane %v751, 2
        %v899 = vsel %vm894, %v896, %v898
        %v900 = vrot.slane %v752, 2
        %v901 = vrot.slane %v753, 2
        %v902 = vsel %vm894, %v900, %v901
        %v903 = vrot.slane %v754, 2
        %v904 = vsel %vm894, %v901, %v903
        %v905 = vrot.slane %v755, 2
        %v906 = vrot.slane %v756, 2
        %v907 = vsel %vm894, %v905, %v906
        %v908 = vrot.slane %v757, 2
        %v909 = vsel %vm894, %v906, %v908
        %v910 = vrot.slane %v758, 2
        %v911 = vrot.slane %v759, 2
        %v912 = vsel %vm894, %v910, %v911
        %v913 = vrot.slane %v760, 2
        %v914 = vsel %vm894, %v911, %v913
        %v915 = vrot.slane %v761, 2
        %v916 = vrot.slane %v762, 2
        %v917 = vsel %vm894, %v915, %v916
        %v918 = vrot.slane %v763, 2
        %v919 = vsel %vm894, %v916, %v918
        %v920 = vrot.slane %v764, 2
        %v921 = vrot.slane %v765, 2
        %v922 = vsel %vm894, %v920, %v921
        %v923 = vrot.slane %v766, 2
        %v924 = vsel %vm894, %v921, %v923
        %v925 = vrot.slane %v767, 2
        %v926 = vrot.slane %v768, 2
        %v927 = vsel %vm894, %v925, %v926
        %v928 = vrot.slane %v769, 2
        %v929 = vsel %vm894, %v926, %v928
        %v930 = vrot.slane %v770, 2
        %v931 = vrot.slane %v771, 2
        %v932 = vsel %vm894, %v930, %v931
        %v933 = vrot.slane %v772, 2
        %v934 = vsel %vm894, %v931, %v933
        %v951 = vadd.f32 %v854, %v897
        %v952 = vadd.f32 %v855, %v899
        %v953 = vadd.f32 %v856, %v902
        %v954 = vadd.f32 %v857, %v904
        %v955 = vadd.f32 %v858, %v907
        %v956 = vadd.f32 %v859, %v909
        %v957 = vadd.f32 %v860, %v912
        %v958 = vadd.f32 %v861, %v914
        %v959 = vadd.f32 %v862, %v917
        %v960 = vadd.f32 %v863, %v919
        %v961 = vadd.f32 %v864, %v922
        %v962 = vadd.f32 %v865, %v924
        %v963 = vadd.f32 %v866, %v927
        %v964 = vadd.f32 %v867, %v929
        %v965 = vadd.f32 %v868, %v932
        %v966 = vadd.f32 %v869, %v934
        %v967 = vpack.c.bf16 %v952, %v951
        %v968 = vpack.c.bf16 %v954, %v953
        %v969 = vpack.c.bf16 %v956, %v955
        %v970 = vpack.c.bf16 %v958, %v957
        %v971 = vpack.c.bf16 %v960, %v959
        %v972 = vpack.c.bf16 %v962, %v961
        %v973 = vpack.c.bf16 %v964, %v963
        %v974 = vpack.c.bf16 %v966, %v965
        %v975 = vld [vmem:[%s2] sm:$0x3]
        %vm976 = vcmask 31744
        %v978 = vsel %vm976, %v967, 0
        %v981 = vsel %vm976, %v968, 0
        %v984 = vsel %vm976, %v969, 0
        %v987 = vsel %vm976, %v970, 0
        %v990 = vsel %vm976, %v971, 0
        %v993 = vsel %vm976, %v972, 0
        %v996 = vsel %vm976, %v973, 0
        %v999 = vsel %vm976, %v974, 0
        %vm1001 = vcmask 1041408
        %v1003 = vsel %vm1001, %v975, 0
        %1005 = vmatpush.bf16.msra.mxu0 0
        %1006 = vmatpush.bf16.msra.mxu0 0
        %1007 = vmatpush.bf16.msra.mxu0 0
        %1008 = vmatpush.bf16.msra.mxu0 0
        %1009 = vmatpush.bf16.msra.mxu0 0
        %1010 = vmatpush.bf16.msra.mxu0 0
        %1011 = vmatpush.bf16.msra.mxu0 0
        %1012 = vmatpush.bf16.msra.mxu0 %v1003
        %1013 = vmatmul.bf16.gmra.mxu0 %v978
        %v1014 = vpop.f32.mrf.mxu0
        %v1015 = vadd.f32 0.0, %v1014
        %v1016 = vpop.f32.mrf.mxu0
        %v1017 = vadd.f32 0.0, %v1016
        %1018 = vmatmul.bf16.gmra.mxu0 %v981
        %v1019 = vpop.f32.mrf.mxu0
        %v1020 = vadd.f32 0.0, %v1019
        %v1021 = vpop.f32.mrf.mxu0
        %v1022 = vadd.f32 0.0, %v1021
        %1023 = vmatmul.bf16.gmra.mxu0 %v984
        %v1024 = vpop.f32.mrf.mxu0
        %v1025 = vadd.f32 0.0, %v1024
        %v1026 = vpop.f32.mrf.mxu0
        %v1027 = vadd.f32 0.0, %v1026
        %1028 = vmatmul.bf16.gmra.mxu0 %v987
        %v1029 = vpop.f32.mrf.mxu0
        %v1030 = vadd.f32 0.0, %v1029
        %v1031 = vpop.f32.mrf.mxu0
        %v1032 = vadd.f32 0.0, %v1031
        %1033 = vmatmul.bf16.gmra.mxu0 %v990
        %v1034 = vpop.f32.mrf.mxu0
        %v1035 = vadd.f32 0.0, %v1034
        %v1036 = vpop.f32.mrf.mxu0
        %v1037 = vadd.f32 0.0, %v1036
        %1038 = vmatmul.bf16.gmra.mxu0 %v993
        %v1039 = vpop.f32.mrf.mxu0
        %v1040 = vadd.f32 0.0, %v1039
        %v1041 = vpop.f32.mrf.mxu0
        %v1042 = vadd.f32 0.0, %v1041
        %1043 = vmatmul.bf16.gmra.mxu0 %v996
        %v1044 = vpop.f32.mrf.mxu0
        %v1045 = vadd.f32 0.0, %v1044
        %v1046 = vpop.f32.mrf.mxu0
        %v1047 = vadd.f32 0.0, %v1046
        %1048 = vmatmul.bf16.gmra.mxu0 %v999
        %v1049 = vpop.f32.mrf.mxu0
        %v1050 = vadd.f32 0.0, %v1049
        %v1051 = vpop.f32.mrf.mxu0
        %v1052 = vadd.f32 0.0, %v1051
        %1053 = vdwg.mxu0
        %v1054 = vpack.c.bf16 %v1015, %v1015
        %v1055 = vpack.c.bf16 %v1017, %v1017
        %v1056 = vpack.c.bf16 %v1020, %v1020
        %v1057 = vpack.c.bf16 %v1022, %v1022
        %v1058 = vpack.c.bf16 %v1025, %v1025
        %v1059 = vpack.c.bf16 %v1027, %v1027
        %v1060 = vpack.c.bf16 %v1030, %v1030
        %v1061 = vpack.c.bf16 %v1032, %v1032
        %v1062 = vpack.c.bf16 %v1035, %v1035
        %v1063 = vpack.c.bf16 %v1037, %v1037
        %v1064 = vpack.c.bf16 %v1040, %v1040
        %v1065 = vpack.c.bf16 %v1042, %v1042
        %v1066 = vpack.c.bf16 %v1045, %v1045
        %v1067 = vpack.c.bf16 %v1047, %v1047
        %v1068 = vpack.c.bf16 %v1050, %v1050
        %v1069 = vpack.c.bf16 %v1052, %v1052
        %1070 = vst [vmem:[%s187] sm:$0xf] %v1054
        %1071 = vst [vmem:[%s187 + $0x4] sm:$0xf] %v1055
        %1072 = vst [vmem:[%s187 + $0x8] sm:$0xf] %v1056
        %1073 = vst [vmem:[%s187 + $0xc] sm:$0xf] %v1057
        %1074 = vst [vmem:[%s187 + $0x10] sm:$0xf] %v1058
        %1075 = vst [vmem:[%s187 + $0x14] sm:$0xf] %v1059
        %1076 = vst [vmem:[%s187 + $0x18] sm:$0xf] %v1060
        %1077 = vst [vmem:[%s187 + $0x1c] sm:$0xf] %v1061
        %1078 = vst [vmem:[%s187 + $0x20] sm:$0xf] %v1062
        %1079 = vst [vmem:[%s187 + $0x24] sm:$0xf] %v1063
        %1080 = vst [vmem:[%s187 + $0x28] sm:$0xf] %v1064
        %1081 = vst [vmem:[%s187 + $0x2c] sm:$0xf] %v1065
        %1082 = vst [vmem:[%s187 + $0x30] sm:$0xf] %v1066
        %1083 = vst [vmem:[%s187 + $0x34] sm:$0xf] %v1067
        %1084 = vst [vmem:[%s187 + $0x38] sm:$0xf] %v1068
        %1085 = vst [vmem:[%s187 + $0x3c] sm:$0xf] %v1069
        %s1086 = sand.u32 %s109, 1
        %s1087 = scalar_lea.sflag [#allocation3], %s1086
        %s1088 = sand.u32 %s109, 1
        %s1089 = smul.addr %s1088, 64
        %s1090 = scalar_lea.vmem [#allocation2], %s1089
        // Predicated region
        $region33: #{tpu_custom_call.1} parent=31 // pred_check
          %p1091 = pneg %p119
        $region34: #{tpu_custom_call.1} parent=31 // pred_check_branch
          %1093 = sbr.rel (%p1091) target = $region36
        $region35: #{tpu_custom_call.1} parent=31 // pred_region
          %s1094 = smul.u32 16, %s22
          %1096 = vsyncadd %s1087, 0
          %s1097 = smul.addr %s21, 32
          %s1098 = sadd.s32 %s1094, %s1097
          %s1099 = smul.addr %s1098, 4
          %s1100 = scalar_lea.hbm %s3, %s1099
          %s1101 = sshll.u32 %s1090, 4
          %s1102 = int_to_ptr.vmem [resolvable:$true] %s1101
          %s1103 = sshll.u32 %s1100, 4
          %s1104 = int_to_ptr.hbm [resolvable:$true] %s1103
          %1109 = dma.vmem_to_hbm [thread:$0]  %s1102, 1024, %s1104, %s1087, 64, 64, 4
        $region36: #{tpu_custom_call.1} parent=31 // pred_fallthru
          _
      $region32: #{tpu_custom_call.1} parent=5 // pred_fallthru
        _
      %p1110 = scmp.le.s32.totalorder 2, %s12
      // Predicated region
      $region37: #{tpu_custom_call.1} parent=5 // pred_check
        %p1111 = pneg %p1110
      $region38: #{tpu_custom_call.1} parent=5 // pred_check_branch
        %1113 = sbr.rel (%p1111) target = $region40
      $region39: #{tpu_custom_call.1} parent=5 // pred_region
        %s1114 = ssub.s32 %s12, 2
        // Predicated region
        $region41: #{tpu_custom_call.1} parent=39 // pred_check
          %p1115 = pneg %p125
        $region42: #{tpu_custom_call.1} parent=39 // pred_check_branch
          %1117 = sbr.rel (%p1115) target = $region44
        $region43: #{tpu_custom_call.1} parent=39 // pred_region
          %s1118 = sand.u32 %s110, 1
          %s1119 = scalar_lea.sflag [#allocation3], %s1118
          %s1120 = sand.u32 %s110, 1
          %s1121 = smul.addr %s1120, 64
          %s1122 = scalar_lea.vmem [#allocation2], %s1121
          %1124 = dma.done %s1119, 1024
        $region44: #{tpu_custom_call.1} parent=39 // pred_fallthru
          _
      $region40: #{tpu_custom_call.1} parent=5 // pred_fallthru
        _
    $region6: #{tpu_custom_call.1} parent=1 // loop_footer
      %s16 = sadd.s32 1, %s12
    $region7: #{tpu_custom_call.1} parent=1 // loop_footer_branch
      %11 = sbr.rel target = $region3
    $region8: #{tpu_custom_call.1} parent=1 // loop_exit
      _
    %1125 = vsyncpa [#allocation3], 1
    %s1126 = scalar_lea.sflag [#allocation3], 1
    %1127 = vsyncpa %s1126, 1

</llo_original>
